<compile_context>
chip_gen: v7x
topology: tpu7x:2x2x1
jax: 0.10.0
libtpu: 0.0.40
codegen_flags: <defaults>
</compile_context>

<pallas_src>
import jax
import jax.numpy as jnp
from jax.experimental import pallas as pl
from jax.experimental.pallas import tpu as pltpu


def _round_up(v, m):
    return (v + m - 1) // m * m


# ----------------------------------------------------------------- adjacency --
def build_normalized_adjacency(edge_index, edge_attr, num_nodes):
    """Dense symmetric-normalized adjacency with self loops (PyG gcn_norm).

    For a static graph this is a one-time precompute: build it once (outside
    the per-step hot path) and cache the result.
    """
    src = edge_index[0]
    dst = edge_index[1]
    loop = jnp.arange(num_nodes, dtype=src.dtype)
    src = jnp.concatenate([src, loop])
    dst = jnp.concatenate([dst, loop])
    w = jnp.concatenate([edge_attr, jnp.ones((num_nodes,), dtype=edge_attr.dtype)])

    deg = jnp.zeros((num_nodes,), dtype=jnp.float32).at[dst].add(w)
    dinv = jnp.where(deg > 0.0, deg ** -0.5, 0.0)
    norm = dinv[src] * w * dinv[dst]
    # out[i] = sum_{(j->i)} norm * x[j]  =>  A_hat[i, j] = norm
    return jnp.zeros((num_nodes, num_nodes), dtype=jnp.float32).at[dst, src].add(norm)


# ------------------------------------------------------------------- wrapper --
def tgcn_forward(x, edge_index, edge_attr, params):
    n, c = x.shape
    hidden = params["w_z"].shape[1]
    out_ch = params["w_reg"].shape[1]

    tm = 128                         # node-row tile (sublane axis of A / out)
    n_pad = _round_up(n, tm)         # N is also the lane/K dim of A@X
    c_pad = _round_up(c, 128)
    h_pad = _round_up(hidden, 128)
    o_pad = _round_up(out_ch, 128)   # lane-dense output head

    f32 = jnp.float32
    a_hat = build_normalized_adjacency(edge_index, edge_attr, n)
    a_pad = jnp.zeros((n_pad, n_pad), f32).at[:n, :n].set(a_hat)
    x_pad = jnp.zeros((n_pad, c_pad), f32).at[:n, :c].set(x)

    def pad2(w, rows, cols):
        return jnp.zeros((rows, cols), f32).at[:w.shape[0], :w.shape[1]].set(w)

    # Fused GCN-conv weights/biases for the two live gates (z, h).
    w_conv = jnp.concatenate(
        [pad2(params["w_z"], c_pad, h_pad), pad2(params["w_h"], c_pad, h_pad)], axis=1)
    b_conv = jnp.concatenate(
        [pad2(params["b_z"], 1, h_pad), pad2(params["b_h"], 1, h_pad)], axis=1)
    # Block-diagonal gate projection: [[lz1, 0], [0, lh1]].
    l_gate = jnp.zeros((2 * h_pad, 2 * h_pad), f32)
    l_gate = l_gate.at[:hidden, :hidden].set(params["lz1"])
    l_gate = l_gate.at[h_pad:h_pad + hidden, h_pad:h_pad + hidden].set(params["lh1"])
    lb_gate = jnp.concatenate(
        [pad2(params["lb_z"], 1, h_pad), pad2(params["lb_h"], 1, h_pad)], axis=1)
    w_reg = pad2(params["w_reg"], h_pad, o_pad)
    b_reg = pad2(params["b_reg"], 1, o_pad)

    def kernel(a_ref, x_ref, wc_ref, bc_ref, lg_ref, lbg_ref, wr_ref, br_ref, o_ref):
        # Aggregate first ((A@X)@W): avoids re-doing X@W for every row tile and
        # contracts over the cheap feature dim second.
        ax = jnp.dot(a_ref[...], x_ref[...], preferred_element_type=jnp.float32)
        conv = jnp.dot(ax, wc_ref[...],
                       preferred_element_type=jnp.float32) + bc_ref[...]   # [Cz|Ch]
        g = jnp.dot(conv, lg_ref[...],
                    preferred_element_type=jnp.float32) + lbg_ref[...]     # [Gz|Gh]
        z = jax.nn.sigmoid(g[:, :h_pad])
        ht = jnp.tanh(g[:, h_pad:])
        hn = (1.0 - z) * ht            # Z*H + (1-Z)*Ht with H == 0
        o_ref[...] = (jnp.dot(hn, wr_ref[...], preferred_element_type=jnp.float32)
                      + br_ref[...])

    def full(shape):
        return pl.BlockSpec(shape, lambda i: (0, 0))

    grid = (n_pad // tm,)

    flops = 2 * n_pad * (n_pad * c_pad + c_pad * 2 * h_pad
                         + 4 * h_pad * h_pad + h_pad * o_pad)
    bytes_accessed = 4 * (n_pad * n_pad + n_pad * c_pad + c_pad * 2 * h_pad
                          + 2 * h_pad + 4 * h_pad * h_pad + 2 * h_pad
                          + h_pad * o_pad + o_pad + n_pad * o_pad)
    cost = pl.CostEstimate(flops=flops,
                           transcendentals=2 * n_pad * h_pad,
                           bytes_accessed=bytes_accessed)

    out_pad = pl.pallas_call(
        kernel,
        out_shape=jax.ShapeDtypeStruct((n_pad, o_pad), jnp.float32),
        grid_spec=pltpu.PrefetchScalarGridSpec(
            num_scalar_prefetch=0,
            grid=grid,
            in_specs=[
                pl.BlockSpec((tm, n_pad), lambda i: (i, 0)),   # A_hat row tile
                full((n_pad, c_pad)),                          # X
                full((c_pad, 2 * h_pad)),                      # [w_z | w_h]
                full((1, 2 * h_pad)),                          # [b_z | b_h]
                full((2 * h_pad, 2 * h_pad)),                  # blockdiag(lz1, lh1)
                full((1, 2 * h_pad)),                          # [lb_z | lb_h]
                full((h_pad, o_pad)),                          # W_reg (lane-padded)
                full((1, o_pad)),                              # b_reg (lane-padded)
            ],
            out_specs=pl.BlockSpec((tm, o_pad), lambda i: (i, 0)),
        ),
        compiler_params=pltpu.CompilerParams(
            dimension_semantics=("parallel",)),
        cost_estimate=cost,
    )(a_pad, x_pad, w_conv, b_conv, l_gate, lb_gate, w_reg, b_reg)

    return out_pad[:n, :out_ch]


# ---------------------------------------------------------- plain-JAX check --
def tgcn_reference(x, edge_index, edge_attr, params):
    """Full TGCN math (including the H- and R-carrying terms) with H0 = 0."""
    a_hat = build_normalized_adjacency(edge_index, edge_attr, x.shape[0])
    hidden = params["w_z"].shape[1]
    H = jnp.zeros((x.shape[0], hidden), dtype=jnp.float32)

    def conv(w, b):
        return a_hat @ (x @ w) + b

    Z = jax.nn.sigmoid(conv(params["w_z"], params["b_z"]) @ params["lz1"]
                       + H @ params["lz2"] + params["lb_z"])
    R = jax.nn.sigmoid(conv(params["w_r"], params["b_r"]) @ params["lr1"]
                       + H @ params["lr2"] + params["lb_r"])
    Ht = jnp.tanh(conv(params["w_h"], params["b_h"]) @ params["lh1"]
                  + (H * R) @ params["lh2"] + params["lb_h"])
    Hn = Z * H + (1.0 - Z) * Ht
    return Hn @ params["w_reg"] + params["b_reg"]


# -------------------------------------------------------------------- main ---
if __name__ == "__main__":
    IN_CH, HIDDEN, OUT_CH = 4, 32, 8
    N_NODES, N_EDGES = 16, 48

    key = jax.random.PRNGKey(0)
    keys = jax.random.split(key, 24)

    def u(k, shape, scale=0.2):
        return jax.random.uniform(k, shape, jnp.float32, -scale, scale)

    # GCNConv weights are stored pre-transposed as [in, hidden]; gate Linear
    # weights over concat([conv, H]) are split into two [hidden, hidden] blocks.
    params = {
        "w_z": u(keys[0], (IN_CH, HIDDEN)), "w_r": u(keys[1], (IN_CH, HIDDEN)),
        "w_h": u(keys[2], (IN_CH, HIDDEN)),
        "b_z": u(keys[3], (1, HIDDEN)), "b_r": u(keys[4], (1, HIDDEN)),
        "b_h": u(keys[5], (1, HIDDEN)),
        "lz1": u(keys[6], (HIDDEN, HIDDEN)), "lz2": u(keys[7], (HIDDEN, HIDDEN)),
        "lr1": u(keys[8], (HIDDEN, HIDDEN)), "lr2": u(keys[9], (HIDDEN, HIDDEN)),
        "lh1": u(keys[10], (HIDDEN, HIDDEN)), "lh2": u(keys[11], (HIDDEN, HIDDEN)),
        "lb_z": u(keys[12], (1, HIDDEN)), "lb_r": u(keys[13], (1, HIDDEN)),
        "lb_h": u(keys[14], (1, HIDDEN)),
        "w_reg": u(keys[15], (HIDDEN, OUT_CH)), "b_reg": u(keys[16], (1, OUT_CH)),
    }

    # Node features [N, in_channels]; random directed edges (no self loops).
    x = jax.random.normal(keys[17], (N_NODES, IN_CH), jnp.float32)
    src = jax.random.randint(keys[18], (N_EDGES,), 0, N_NODES)
    dst = (src + 1 + jax.random.randint(keys[19], (N_EDGES,), 0, N_NODES - 1)) % N_NODES
    edge_index = jnp.stack([src, dst]).astype(jnp.int32)
    edge_attr = jax.random.uniform(keys[20], (N_EDGES,), jnp.float32, 0.1, 1.0)

    out = tgcn_forward(x, edge_index, edge_attr, params)
    out = jax.block_until_ready(out)

    ref = tgcn_reference(x, edge_index, edge_attr, params)
    assert out.shape == (N_NODES, OUT_CH)
    assert jnp.allclose(out, ref, atol=5e-5, rtol=1e-5)

    print("KERNEL_OK")
</pallas_src>

<mosaic_0001>
module attributes {stable_mosaic.version = 11 : i64} {
  func.func @kernel(%arg0: i32, %arg1: memref<128x128xf32, #tpu.memory_space<vmem>>, %arg2: memref<128x128xf32, #tpu.memory_space<vmem>>, %arg3: memref<128x256xf32, #tpu.memory_space<vmem>>, %arg4: memref<1x256xf32, #tpu.memory_space<vmem>>, %arg5: memref<256x256xf32, #tpu.memory_space<vmem>>, %arg6: memref<1x256xf32, #tpu.memory_space<vmem>>, %arg7: memref<128x128xf32, #tpu.memory_space<vmem>>, %arg8: memref<1x128xf32, #tpu.memory_space<vmem>>, %arg9: memref<128x128xf32, #tpu.memory_space<vmem>>) attributes {dimension_semantics = [#tpu.dimension_semantics<parallel>], iteration_bounds = array<i64: 1>, scalar_prefetch = 0 : i64, scratch_operands = 0 : i64, tpu.core_type = #tpu.core_type<tc>, window_params = [{transform_indices = @transform_0, window_bounds = array<i64: 128, 128>}, {pipeline_mode = #tpu.pipeline_mode<synchronous>, transform_indices = @transform_1, window_bounds = array<i64: 128, 128>}, {pipeline_mode = #tpu.pipeline_mode<synchronous>, transform_indices = @transform_2, window_bounds = array<i64: 128, 256>}, {pipeline_mode = #tpu.pipeline_mode<synchronous>, transform_indices = @transform_3, window_bounds = array<i64: 1, 256>}, {pipeline_mode = #tpu.pipeline_mode<synchronous>, transform_indices = @transform_4, window_bounds = array<i64: 256, 256>}, {pipeline_mode = #tpu.pipeline_mode<synchronous>, transform_indices = @transform_5, window_bounds = array<i64: 1, 256>}, {pipeline_mode = #tpu.pipeline_mode<synchronous>, transform_indices = @transform_6, window_bounds = array<i64: 128, 128>}, {pipeline_mode = #tpu.pipeline_mode<synchronous>, transform_indices = @transform_7, window_bounds = array<i64: 1, 128>}, {transform_indices = @transform_8, window_bounds = array<i64: 128, 128>}]} {
    %c0 = arith.constant 0 : index
    %c0_0 = arith.constant 0 : index
    %0 = vector.load %arg1[%c0, %c0_0] : memref<128x128xf32, #tpu.memory_space<vmem>>, vector<128x128xf32>
    %c0_1 = arith.constant 0 : index
    %c0_2 = arith.constant 0 : index
    %1 = vector.load %arg2[%c0_1, %c0_2] : memref<128x128xf32, #tpu.memory_space<vmem>>, vector<128x128xf32>
    %cst = arith.constant dense<0.000000e+00> : vector<128x128xf32>
    %2 = tpu.matmul %0, %1, %cst {dimension_numbers = #tpu.dot_dimension_numbers<[1], [0], [0], [1], [0, 0, 1, 1], [], []>} : vector<128x128xf32>, vector<128x128xf32>, vector<128x128xf32> -> vector<128x128xf32>
    %c0_3 = arith.constant 0 : index
    %c0_4 = arith.constant 0 : index
    %3 = vector.load %arg3[%c0_3, %c0_4] : memref<128x256xf32, #tpu.memory_space<vmem>>, vector<128x256xf32>
    %cst_5 = arith.constant dense<0.000000e+00> : vector<128x256xf32>
    %4 = tpu.matmul %2, %3, %cst_5 {dimension_numbers = #tpu.dot_dimension_numbers<[1], [0], [0], [1], [0, 0, 1, 1], [], []>} : vector<128x128xf32>, vector<128x256xf32>, vector<128x256xf32> -> vector<128x256xf32>
    %c0_6 = arith.constant 0 : index
    %c0_7 = arith.constant 0 : index
    %5 = vector.load %arg4[%c0_6, %c0_7] : memref<1x256xf32, #tpu.memory_space<vmem>>, vector<1x256xf32>
    %6 = vector.broadcast %5 : vector<1x256xf32> to vector<128x256xf32>
    %7 = arith.addf %4, %6 : vector<128x256xf32>
    %c0_8 = arith.constant 0 : index
    %c0_9 = arith.constant 0 : index
    %8 = vector.load %arg5[%c0_8, %c0_9] : memref<256x256xf32, #tpu.memory_space<vmem>>, vector<256x256xf32>
    %cst_10 = arith.constant dense<0.000000e+00> : vector<128x256xf32>
    %9 = tpu.matmul %7, %8, %cst_10 {dimension_numbers = #tpu.dot_dimension_numbers<[1], [0], [0], [1], [0, 0, 1, 1], [], []>} : vector<128x256xf32>, vector<256x256xf32>, vector<128x256xf32> -> vector<128x256xf32>
    %c0_11 = arith.constant 0 : index
    %c0_12 = arith.constant 0 : index
    %10 = vector.load %arg6[%c0_11, %c0_12] : memref<1x256xf32, #tpu.memory_space<vmem>>, vector<1x256xf32>
    %11 = vector.broadcast %10 : vector<1x256xf32> to vector<128x256xf32>
    %12 = arith.addf %9, %11 : vector<128x256xf32>
    %13 = vector.extract_strided_slice %12 {offsets = [0, 0], sizes = [128, 128], strides = [1, 1]} : vector<128x256xf32> to vector<128x128xf32>
    %14 = arith.negf %13 : vector<128x128xf32>
    %15 = math.exp %14 : vector<128x128xf32>
    %cst_13 = arith.constant 1.000000e+00 : f32
    %16 = vector.broadcast %cst_13 : f32 to vector<128x128xf32>
    %17 = arith.addf %16, %15 : vector<128x128xf32>
    %18 = arith.divf %16, %17 : vector<128x128xf32>
    %19 = vector.extract_strided_slice %12 {offsets = [0, 128], sizes = [128, 128], strides = [1, 1]} : vector<128x256xf32> to vector<128x128xf32>
    %20 = math.tanh %19 : vector<128x128xf32>
    %cst_14 = arith.constant 1.000000e+00 : f32
    %21 = vector.broadcast %cst_14 : f32 to vector<128x128xf32>
    %22 = arith.subf %21, %18 : vector<128x128xf32>
    %23 = arith.mulf %22, %20 : vector<128x128xf32>
    %c0_15 = arith.constant 0 : index
    %c0_16 = arith.constant 0 : index
    %24 = vector.load %arg7[%c0_15, %c0_16] : memref<128x128xf32, #tpu.memory_space<vmem>>, vector<128x128xf32>
    %cst_17 = arith.constant dense<0.000000e+00> : vector<128x128xf32>
    %25 = tpu.matmul %23, %24, %cst_17 {dimension_numbers = #tpu.dot_dimension_numbers<[1], [0], [0], [1], [0, 0, 1, 1], [], []>} : vector<128x128xf32>, vector<128x128xf32>, vector<128x128xf32> -> vector<128x128xf32>
    %c0_18 = arith.constant 0 : index
    %c0_19 = arith.constant 0 : index
    %26 = vector.load %arg8[%c0_18, %c0_19] : memref<1x128xf32, #tpu.memory_space<vmem>>, vector<1x128xf32>
    %27 = vector.broadcast %26 : vector<1x128xf32> to vector<128x128xf32>
    %28 = arith.addf %25, %27 : vector<128x128xf32>
    %c0_20 = arith.constant 0 : index
    %c0_21 = arith.constant 0 : index
    %29 = vector.load %arg9[%c0_20, %c0_21] : memref<128x128xf32, #tpu.memory_space<vmem>>, vector<128x128xf32>
    tpu.vector_store %arg9[%c0_20, %c0_21], %28 {strides = array<i32>} : memref<128x128xf32, #tpu.memory_space<vmem>>, vector<128x128xf32>,
    return
  }
  func.func @transform_0(%arg0: i32) -> (i32, i32) {
    %c0_i32 = arith.constant 0 : i32
    %c0_i32_0 = arith.constant 0 : i32
    return %arg0, %c0_i32 : i32, i32
  }
  func.func @transform_1(%arg0: i32) -> (i32, i32) {
    %c0_i32 = arith.constant 0 : i32
    %c0_i32_0 = arith.constant 0 : i32
    %c0_i32_1 = arith.constant 0 : i32
    return %c0_i32, %c0_i32_0 : i32, i32
  }
  func.func @transform_2(%arg0: i32) -> (i32, i32) {
    %c0_i32 = arith.constant 0 : i32
    %c0_i32_0 = arith.constant 0 : i32
    %c0_i32_1 = arith.constant 0 : i32
    return %c0_i32, %c0_i32_0 : i32, i32
  }
  func.func @transform_3(%arg0: i32) -> (i32, i32) {
    %c0_i32 = arith.constant 0 : i32
    %c0_i32_0 = arith.constant 0 : i32
    %c0_i32_1 = arith.constant 0 : i32
    return %c0_i32, %c0_i32_0 : i32, i32
  }
  func.func @transform_4(%arg0: i32) -> (i32, i32) {
    %c0_i32 = arith.constant 0 : i32
    %c0_i32_0 = arith.constant 0 : i32
    %c0_i32_1 = arith.constant 0 : i32
    return %c0_i32, %c0_i32_0 : i32, i32
  }
  func.func @transform_5(%arg0: i32) -> (i32, i32) {
    %c0_i32 = arith.constant 0 : i32
    %c0_i32_0 = arith.constant 0 : i32
    %c0_i32_1 = arith.constant 0 : i32
    return %c0_i32, %c0_i32_0 : i32, i32
  }
  func.func @transform_6(%arg0: i32) -> (i32, i32) {
    %c0_i32 = arith.constant 0 : i32
    %c0_i32_0 = arith.constant 0 : i32
    %c0_i32_1 = arith.constant 0 : i32
    return %c0_i32, %c0_i32_0 : i32, i32
  }
  func.func @transform_7(%arg0: i32) -> (i32, i32) {
    %c0_i32 = arith.constant 0 : i32
    %c0_i32_0 = arith.constant 0 : i32
    %c0_i32_1 = arith.constant 0 : i32
    return %c0_i32, %c0_i32_0 : i32, i32
  }
  func.func @transform_8(%arg0: i32) -> (i32, i32) {
    %c0_i32 = arith.constant 0 : i32
    %c0_i32_0 = arith.constant 0 : i32
    return %arg0, %c0_i32 : i32, i32
  }
}

</mosaic_0001>

<llo_original>
// kernel: tpu_custom_call.1
$region0: #{tpu_custom_call.1}
  #allocation0 [shape = 'u32[]', space=smem, size = 0x4, offset = 0x4, fixed_abs, tag = 'smem constant byte address 0x4 - core index']
  #allocation1 [shape = 'u32[144,128]{1,0:T(1,128)}', space=vmem, size = 0x12000, scoped, tag = 'internal scratch']
  %s0 = inlined_call_operand.hbm [shape: f32[128,128], index: 0, kind: input, shape index: {}]
  %s1 = inlined_call_operand.hbm [shape: f32[128,128], index: 1, kind: input, shape index: {}]
  %s2 = inlined_call_operand.hbm [shape: f32[128,256], index: 2, kind: input, shape index: {}]
  %s3 = inlined_call_operand.vmem [shape: f32[1,256], index: 3, kind: input, shape index: {}]
  %s4 = inlined_call_operand.hbm [shape: f32[256,256], index: 4, kind: input, shape index: {}]
  %s5 = inlined_call_operand.vmem [shape: f32[1,256], index: 5, kind: input, shape index: {}]
  %s6 = inlined_call_operand.hbm [shape: f32[128,128], index: 6, kind: input, shape index: {}]
  %s7 = inlined_call_operand.vmem [shape: f32[1,128], index: 7, kind: input, shape index: {}]
  %s8 = inlined_call_operand.hbm [shape: f32[128,128], index: 8, kind: output, shape index: {}]
  %s9 = sld [smem:[#allocation0]]
  $region62: #{tpu_custom_call.1} parent=0
    _
  %s11 = ssub.s32 1, %s9
  %s12 = scalar_select 0, %s11, %s9
  $region1: #{tpu_custom_call.1} parent=0
    #allocation2 [shape = 'u8[65536]{0}', space=vmem, size = 0x10000, scoped, tag = 'input window, operand 0, single buffered']
    #allocation3 [shape = 's32[1]{0}', space=sflag, size = 0x4, scoped, tag = 'scoped memory for tpu_custom_call.1']
    #allocation4 [shape = 's32[1]{0}', space=sflag, size = 0x4, scoped, tag = 'scoped memory for tpu_custom_call.1']
    #allocation5 [shape = 'u8[65536]{0}', space=vmem, size = 0x10000, scoped, tag = 'input window, operand 1, single buffered']
    #allocation6 [shape = 's32[1]{0}', space=sflag, size = 0x4, scoped, tag = 'scoped memory for tpu_custom_call.1']
    #allocation7 [shape = 'u8[131072]{0}', space=vmem, size = 0x20000, scoped, tag = 'input window, operand 2, single buffered']
    #allocation8 [shape = 'u8[262144]{0}', space=vmem, size = 0x40000, scoped, tag = 'input window, operand 4, single buffered']
    #allocation9 [shape = 's32[1]{0}', space=sflag, size = 0x4, scoped, tag = 'scoped memory for tpu_custom_call.1']
    #allocation10 [shape = 'u8[65536]{0}', space=vmem, size = 0x10000, scoped, tag = 'input window, operand 6, single buffered']
    #allocation11 [shape = 'u8[65536]{0}', space=vmem, size = 0x10000, scoped, tag = 'output window, operand 0, single buffered']
    %13 = vsyncpa [#allocation3], 0
    %14 = vsyncpa [#allocation6], 0
    %15 = vsyncpa [#allocation9], 0
    %16 = vsyncpa [#allocation4], 0
    // Predicated region
    $region2: #{tpu_custom_call.1} parent=1 // pred_check
      _
    $region3: #{tpu_custom_call.1} parent=1 // pred_check_branch
      %18 = sbr.rel (0) target = $region5
    $region4: #{tpu_custom_call.1} parent=1 // pred_region
      %s20 = ssub.s32 2048, 2048
      %21 = vsyncadd [#allocation3], %s20
      %s22 = sshll.u32 [#allocation2], 4
      %s23 = int_to_ptr.vmem [resolvable:$true] %s22
      %28 = dma.hbm_to_vmem [thread:$0]  %s0, 2048, %s23, [#allocation3], 128, 128, 8
    $region5: #{tpu_custom_call.1} parent=1 // pred_fallthru
      _
    // Predicated region
    $region6: #{tpu_custom_call.1} parent=1 // pred_check
      _
    $region7: #{tpu_custom_call.1} parent=1 // pred_check_branch
      %30 = sbr.rel (0) target = $region9
    $region8: #{tpu_custom_call.1} parent=1 // pred_region
      %s32 = ssub.s32 2048, 2048
      %33 = vsyncadd [#allocation6], %s32
      %s34 = sshll.u32 [#allocation5], 4
      %s35 = int_to_ptr.vmem [resolvable:$true] %s34
      %40 = dma.hbm_to_vmem [thread:$0]  %s1, 2048, %s35, [#allocation6], 128, 128, 8
    $region9: #{tpu_custom_call.1} parent=1 // pred_fallthru
      _
    // Predicated region
    $region10: #{tpu_custom_call.1} parent=1 // pred_check
      _
    $region11: #{tpu_custom_call.1} parent=1 // pred_check_branch
      %42 = sbr.rel (0) target = $region13
    $region12: #{tpu_custom_call.1} parent=1 // pred_region
      %s44 = ssub.s32 4096, 4096
      %45 = vsyncadd [#allocation6], %s44
      %s46 = sshll.u32 [#allocation7], 4
      %s47 = int_to_ptr.vmem [resolvable:$true] %s46
      %52 = dma.hbm_to_vmem [thread:$0]  %s2, 4096, %s47, [#allocation6], 256, 256, 16
    $region13: #{tpu_custom_call.1} parent=1 // pred_fallthru
      _
    // Predicated region
    $region14: #{tpu_custom_call.1} parent=1 // pred_check
      _
    $region15: #{tpu_custom_call.1} parent=1 // pred_check_branch
      %54 = sbr.rel (0) target = $region17
    $region16: #{tpu_custom_call.1} parent=1 // pred_region
      _
    $region17: #{tpu_custom_call.1} parent=1 // pred_fallthru
      _
    // Predicated region
    $region18: #{tpu_custom_call.1} parent=1 // pred_check
      _
    $region19: #{tpu_custom_call.1} parent=1 // pred_check_branch
      %56 = sbr.rel (0) target = $region21
    $region20: #{tpu_custom_call.1} parent=1 // pred_region
      %s58 = ssub.s32 8192, 8192
      %59 = vsyncadd [#allocation9], %s58
      %s60 = sshll.u32 [#allocation8], 4
      %s61 = int_to_ptr.vmem [resolvable:$true] %s60
      %66 = dma.hbm_to_vmem [thread:$0]  %s4, 8192, %s61, [#allocation9], 256, 256, 16
    $region21: #{tpu_custom_call.1} parent=1 // pred_fallthru
      _
    // Predicated region
    $region22: #{tpu_custom_call.1} parent=1 // pred_check
      _
    $region23: #{tpu_custom_call.1} parent=1 // pred_check_branch
      %68 = sbr.rel (0) target = $region25
    $region24: #{tpu_custom_call.1} parent=1 // pred_region
      _
    $region25: #{tpu_custom_call.1} parent=1 // pred_fallthru
      _
    // Predicated region
    $region26: #{tpu_custom_call.1} parent=1 // pred_check
      _
    $region27: #{tpu_custom_call.1} parent=1 // pred_check_branch
      %70 = sbr.rel (0) target = $region29
    $region28: #{tpu_custom_call.1} parent=1 // pred_region
      %s72 = ssub.s32 2048, 2048
      %73 = vsyncadd [#allocation9], %s72
      %s74 = sshll.u32 [#allocation10], 4
      %s75 = int_to_ptr.vmem [resolvable:$true] %s74
      %80 = dma.hbm_to_vmem [thread:$0]  %s6, 2048, %s75, [#allocation9], 128, 128, 8
    $region29: #{tpu_custom_call.1} parent=1 // pred_fallthru
      _
    // Predicated region
    $region30: #{tpu_custom_call.1} parent=1 // pred_check
      _
    $region31: #{tpu_custom_call.1} parent=1 // pred_check_branch
      %82 = sbr.rel (0) target = $region33
    $region32: #{tpu_custom_call.1} parent=1 // pred_region
      _
    $region33: #{tpu_custom_call.1} parent=1 // pred_fallthru
      _
    // Predicated region
    $region34: #{tpu_custom_call.1} parent=1 // pred_check
      _
    $region35: #{tpu_custom_call.1} parent=1 // pred_check_branch
      %84 = sbr.rel (0) target = $region37
    $region36: #{tpu_custom_call.1} parent=1 // pred_region
      %85 = dma.done [#allocation3], 2048
    $region37: #{tpu_custom_call.1} parent=1 // pred_fallthru
      _
    // Predicated region
    $region38: #{tpu_custom_call.1} parent=1 // pred_check
      _
    $region39: #{tpu_custom_call.1} parent=1 // pred_check_branch
      %87 = sbr.rel (0) target = $region41
    $region40: #{tpu_custom_call.1} parent=1 // pred_region
      %88 = dma.done [#allocation6], 2048
    $region41: #{tpu_custom_call.1} parent=1 // pred_fallthru
      _
    // Predicated region
    $region42: #{tpu_custom_call.1} parent=1 // pred_check
      _
    $region43: #{tpu_custom_call.1} parent=1 // pred_check_branch
      %90 = sbr.rel (0) target = $region45
    $region44: #{tpu_custom_call.1} parent=1 // pred_region
      %91 = dma.done [#allocation6], 4096
    $region45: #{tpu_custom_call.1} parent=1 // pred_fallthru
      _
    // Predicated region
    $region46: #{tpu_custom_call.1} parent=1 // pred_check
      _
    $region47: #{tpu_custom_call.1} parent=1 // pred_check_branch
      %93 = sbr.rel (0) target = $region49
    $region48: #{tpu_custom_call.1} parent=1 // pred_region
      %94 = dma.done [#allocation9], 8192
    $region49: #{tpu_custom_call.1} parent=1 // pred_fallthru
      _
    // Predicated region
    $region50: #{tpu_custom_call.1} parent=1 // pred_check
      _
    $region51: #{tpu_custom_call.1} parent=1 // pred_check_branch
      %96 = sbr.rel (0) target = $region53
    $region52: #{tpu_custom_call.1} parent=1 // pred_region
      %97 = dma.done [#allocation9], 2048
    $region53: #{tpu_custom_call.1} parent=1 // pred_fallthru
      _
    %v98 = vld [vmem:[#allocation2] sm:$0xff]
    %v99 = vld [vmem:[#allocation2 + $0x8] sm:$0xff]
    %v100 = vld [vmem:[#allocation2 + $0x10] sm:$0xff]
    %v101 = vld [vmem:[#allocation2 + $0x18] sm:$0xff]
    %v102 = vld [vmem:[#allocation2 + $0x20] sm:$0xff]
    %v103 = vld [vmem:[#allocation2 + $0x28] sm:$0xff]
    %v104 = vld [vmem:[#allocation2 + $0x30] sm:$0xff]
    %v105 = vld [vmem:[#allocation2 + $0x38] sm:$0xff]
    %v106 = vld [vmem:[#allocation2 + $0x40] sm:$0xff]
    %v107 = vld [vmem:[#allocation2 + $0x48] sm:$0xff]
    %v108 = vld [vmem:[#allocation2 + $0x50] sm:$0xff]
    %v109 = vld [vmem:[#allocation2 + $0x58] sm:$0xff]
    %v110 = vld [vmem:[#allocation2 + $0x60] sm:$0xff]
    %v111 = vld [vmem:[#allocation2 + $0x68] sm:$0xff]
    %v112 = vld [vmem:[#allocation2 + $0x70] sm:$0xff]
    %v113 = vld [vmem:[#allocation2 + $0x78] sm:$0xff]
    %v114 = vld [vmem:[#allocation5] sm:$0xff]
    %v115 = vld [vmem:[#allocation5 + $0x8] sm:$0xff]
    %v116 = vld [vmem:[#allocation5 + $0x10] sm:$0xff]
    %v117 = vld [vmem:[#allocation5 + $0x18] sm:$0xff]
    %v118 = vld [vmem:[#allocation5 + $0x20] sm:$0xff]
    %v119 = vld [vmem:[#allocation5 + $0x28] sm:$0xff]
    %v120 = vld [vmem:[#allocation5 + $0x30] sm:$0xff]
    %v121 = vld [vmem:[#allocation5 + $0x38] sm:$0xff]
    %v122 = vld [vmem:[#allocation5 + $0x40] sm:$0xff]
    %v123 = vld [vmem:[#allocation5 + $0x48] sm:$0xff]
    %v124 = vld [vmem:[#allocation5 + $0x50] sm:$0xff]
    %v125 = vld [vmem:[#allocation5 + $0x58] sm:$0xff]
    %v126 = vld [vmem:[#allocation5 + $0x60] sm:$0xff]
    %v127 = vld [vmem:[#allocation5 + $0x68] sm:$0xff]
    %v128 = vld [vmem:[#allocation5 + $0x70] sm:$0xff]
    %v129 = vld [vmem:[#allocation5 + $0x78] sm:$0xff]
    %130 = vmatprep.subr.mxu0 0.0
    %131 = vmatpush1.msra.mxu0 %v114
    %132 = vmatprep.subr.mxu0 0.0
    %133 = vmatpush1.msra.mxu0 %v115
    %134 = vmatprep.subr.mxu0 0.0
    %135 = vmatpush1.msra.mxu0 %v116
    %136 = vmatprep.subr.mxu0 0.0
    %137 = vmatpush1.msra.mxu0 %v117
    %138 = vmatprep.subr.mxu0 0.0
    %139 = vmatpush1.msra.mxu0 %v118
    %140 = vmatprep.subr.mxu0 0.0
    %141 = vmatpush1.msra.mxu0 %v119
    %142 = vmatprep.subr.mxu0 0.0
    %143 = vmatpush1.msra.mxu0 %v120
    %144 = vmatprep.subr.mxu0 0.0
    %145 = vmatpush1.msra.mxu0 %v121
    %146 = vmatprep.subr.mxu0 0.0
    %147 = vmatpush1.msra.mxu0 %v122
    %148 = vmatprep.subr.mxu0 0.0
    %149 = vmatpush1.msra.mxu0 %v123
    %150 = vmatprep.subr.mxu0 0.0
    %151 = vmatpush1.msra.mxu0 %v124
    %152 = vmatprep.subr.mxu0 0.0
    %153 = vmatpush1.msra.mxu0 %v125
    %154 = vmatprep.subr.mxu0 0.0
    %155 = vmatpush1.msra.mxu0 %v126
    %156 = vmatprep.subr.mxu0 0.0
    %157 = vmatpush1.msra.mxu0 %v127
    %158 = vmatprep.subr.mxu0 0.0
    %159 = vmatpush1.msra.mxu0 %v128
    %160 = vmatprep.subr.mxu0 0.0
    %161 = vmatpush1.msra.mxu0 %v129
    %162 = vmatprep.subr.mxu0 0.0
    %163 = vmatpush1.msra.mxu0 0.0
    %164 = vmatprep.subr.mxu0 0.0
    %165 = vmatpush1.msra.mxu0 0.0
    %166 = vmatprep.subr.mxu0 0.0
    %167 = vmatpush1.msra.mxu0 0.0
    %168 = vmatprep.subr.mxu0 0.0
    %169 = vmatpush1.msra.mxu0 0.0
    %170 = vmatprep.subr.mxu0 0.0
    %171 = vmatpush1.msra.mxu0 0.0
    %172 = vmatprep.subr.mxu0 0.0
    %173 = vmatpush1.msra.mxu0 0.0
    %174 = vmatprep.subr.mxu0 0.0
    %175 = vmatpush1.msra.mxu0 0.0
    %176 = vmatprep.subr.mxu0 0.0
    %177 = vmatpush1.msra.mxu0 0.0
    %178 = vmatprep.subr.mxu0 0.0
    %179 = vmatpush1.msra.mxu0 0.0
    %180 = vmatprep.subr.mxu0 0.0
    %181 = vmatpush1.msra.mxu0 0.0
    %182 = vmatprep.subr.mxu0 0.0
    %183 = vmatpush1.msra.mxu0 0.0
    %184 = vmatprep.subr.mxu0 0.0
    %185 = vmatpush1.msra.mxu0 0.0
    %186 = vmatprep.subr.mxu0 0.0
    %187 = vmatpush1.msra.mxu0 0.0
    %188 = vmatprep.subr.mxu0 0.0
    %189 = vmatpush1.msra.mxu0 0.0
    %190 = vmatprep.subr.mxu0 0.0
    %191 = vmatpush1.msra.mxu0 0.0
    %192 = vmatprep.subr.mxu0 0.0
    %193 = vmatpush1.msra.mxu0 0.0
    %194 = vmatprep.mubr.f32.mxu0 0.0
    %195 = vmatmul.mubr.f32.gmra.mrb[0].mxu0 %v98
    %v196 = vpop.f32.mrb[0].mxu0
    %v197 = vadd.f32 0.0, %v196
    %v198 = vpop.f32.mrb[0].mxu0
    %199 = vmatprep.mubr.f32.mxu0 0.0
    %200 = vmatmul.mubr.f32.gmra.mrb[0].mxu0 %v99
    %v201 = vpop.f32.mrb[0].mxu0
    %v202 = vadd.f32 0.0, %v201
    %v203 = vpop.f32.mrb[0].mxu0
    %204 = vmatprep.mubr.f32.mxu0 0.0
    %205 = vmatmul.mubr.f32.gmra.mrb[0].mxu0 %v100
    %v206 = vpop.f32.mrb[0].mxu0
    %v207 = vadd.f32 0.0, %v206
    %v208 = vpop.f32.mrb[0].mxu0
    %209 = vmatprep.mubr.f32.mxu0 0.0
    %210 = vmatmul.mubr.f32.gmra.mrb[0].mxu0 %v101
    %v211 = vpop.f32.mrb[0].mxu0
    %v212 = vadd.f32 0.0, %v211
    %v213 = vpop.f32.mrb[0].mxu0
    %214 = vmatprep.mubr.f32.mxu0 0.0
    %215 = vmatmul.mubr.f32.gmra.mrb[0].mxu0 %v102
    %v216 = vpop.f32.mrb[0].mxu0
    %v217 = vadd.f32 0.0, %v216
    %v218 = vpop.f32.mrb[0].mxu0
    %219 = vmatprep.mubr.f32.mxu0 0.0
    %220 = vmatmul.mubr.f32.gmra.mrb[0].mxu0 %v103
    %v221 = vpop.f32.mrb[0].mxu0
    %v222 = vadd.f32 0.0, %v221
    %v223 = vpop.f32.mrb[0].mxu0
    %224 = vmatprep.mubr.f32.mxu0 0.0
    %225 = vmatmul.mubr.f32.gmra.mrb[0].mxu0 %v104
    %v226 = vpop.f32.mrb[0].mxu0
    %v227 = vadd.f32 0.0, %v226
    %v228 = vpop.f32.mrb[0].mxu0
    %229 = vmatprep.mubr.f32.mxu0 0.0
    %230 = vmatmul.mubr.f32.gmra.mrb[0].mxu0 %v105
    %v231 = vpop.f32.mrb[0].mxu0
    %v232 = vadd.f32 0.0, %v231
    %v233 = vpop.f32.mrb[0].mxu0
    %234 = vmatprep.mubr.f32.mxu0 0.0
    %235 = vmatmul.mubr.f32.gmra.mrb[0].mxu0 %v106
    %v236 = vpop.f32.mrb[0].mxu0
    %v237 = vadd.f32 0.0, %v236
    %v238 = vpop.f32.mrb[0].mxu0
    %239 = vmatprep.mubr.f32.mxu0 0.0
    %240 = vmatmul.mubr.f32.gmra.mrb[0].mxu0 %v107
    %v241 = vpop.f32.mrb[0].mxu0
    %v242 = vadd.f32 0.0, %v241
    %v243 = vpop.f32.mrb[0].mxu0
    %244 = vmatprep.mubr.f32.mxu0 0.0
    %245 = vmatmul.mubr.f32.gmra.mrb[0].mxu0 %v108
    %v246 = vpop.f32.mrb[0].mxu0
    %v247 = vadd.f32 0.0, %v246
    %v248 = vpop.f32.mrb[0].mxu0
    %249 = vmatprep.mubr.f32.mxu0 0.0
    %250 = vmatmul.mubr.f32.gmra.mrb[0].mxu0 %v109
    %v251 = vpop.f32.mrb[0].mxu0
    %v252 = vadd.f32 0.0, %v251
    %v253 = vpop.f32.mrb[0].mxu0
    %254 = vmatprep.mubr.f32.mxu0 0.0
    %255 = vmatmul.mubr.f32.gmra.mrb[0].mxu0 %v110
    %v256 = vpop.f32.mrb[0].mxu0
    %v257 = vadd.f32 0.0, %v256
    %v258 = vpop.f32.mrb[0].mxu0
    %259 = vmatprep.mubr.f32.mxu0 0.0
    %260 = vmatmul.mubr.f32.gmra.mrb[0].mxu0 %v111
    %v261 = vpop.f32.mrb[0].mxu0
    %v262 = vadd.f32 0.0, %v261
    %v263 = vpop.f32.mrb[0].mxu0
    %264 = vmatprep.mubr.f32.mxu0 0.0
    %265 = vmatmul.mubr.f32.gmra.mrb[0].mxu0 %v112
    %v266 = vpop.f32.mrb[0].mxu0
    %v267 = vadd.f32 0.0, %v266
    %v268 = vpop.f32.mrb[0].mxu0
    %269 = vmatprep.mubr.f32.mxu0 0.0
    %270 = vmatmul.mubr.f32.gmra.mrb[0].mxu0 %v113
    %v271 = vpop.f32.mrb[0].mxu0
    %v272 = vadd.f32 0.0, %v271
    %v273 = vpop.f32.mrb[0].mxu0
    %274 = vdwg.mxu0
    %v275 = vld [vmem:[#allocation7] sm:$0xff]
    %v276 = vld [vmem:[#allocation7 + $0x8] sm:$0xff]
    %v277 = vld [vmem:[#allocation7 + $0x10] sm:$0xff]
    %v278 = vld [vmem:[#allocation7 + $0x18] sm:$0xff]
    %v279 = vld [vmem:[#allocation7 + $0x20] sm:$0xff]
    %v280 = vld [vmem:[#allocation7 + $0x28] sm:$0xff]
    %v281 = vld [vmem:[#allocation7 + $0x30] sm:$0xff]
    %v282 = vld [vmem:[#allocation7 + $0x38] sm:$0xff]
    %v283 = vld [vmem:[#allocation7 + $0x40] sm:$0xff]
    %v284 = vld [vmem:[#allocation7 + $0x48] sm:$0xff]
    %v285 = vld [vmem:[#allocation7 + $0x50] sm:$0xff]
    %v286 = vld [vmem:[#allocation7 + $0x58] sm:$0xff]
    %v287 = vld [vmem:[#allocation7 + $0x60] sm:$0xff]
    %v288 = vld [vmem:[#allocation7 + $0x68] sm:$0xff]
    %v289 = vld [vmem:[#allocation7 + $0x70] sm:$0xff]
    %v290 = vld [vmem:[#allocation7 + $0x78] sm:$0xff]
    %v291 = vld [vmem:[#allocation7 + $0x80] sm:$0xff]
    %v292 = vld [vmem:[#allocation7 + $0x88] sm:$0xff]
    %v293 = vld [vmem:[#allocation7 + $0x90] sm:$0xff]
    %v294 = vld [vmem:[#allocation7 + $0x98] sm:$0xff]
    %v295 = vld [vmem:[#allocation7 + $0xa0] sm:$0xff]
    %v296 = vld [vmem:[#allocation7 + $0xa8] sm:$0xff]
    %v297 = vld [vmem:[#allocation7 + $0xb0] sm:$0xff]
    %v298 = vld [vmem:[#allocation7 + $0xb8] sm:$0xff]
    %v299 = vld [vmem:[#allocation7 + $0xc0] sm:$0xff]
    %v300 = vld [vmem:[#allocation7 + $0xc8] sm:$0xff]
    %v301 = vld [vmem:[#allocation7 + $0xd0] sm:$0xff]
    %v302 = vld [vmem:[#allocation7 + $0xd8] sm:$0xff]
    %v303 = vld [vmem:[#allocation7 + $0xe0] sm:$0xff]
    %v304 = vld [vmem:[#allocation7 + $0xe8] sm:$0xff]
    %v305 = vld [vmem:[#allocation7 + $0xf0] sm:$0xff]
    %v306 = vld [vmem:[#allocation7 + $0xf8] sm:$0xff]
    %v307 = vld [vmem:[%s3] sm:$0x3]
    %v309 = vlaneseq
    %v310 = vshrl.u32 %v309, 7
    %v311 = vsub.s32 0, %v310
    %v312 = vrot.slane %v307, %v311
    %v313 = vlaneseq
    %v314 = vshrl.u32 %v313, 7
    %v315 = vsub.s32 1, %v314
    %v316 = vrot.slane %v307, %v315
    %319 = vmatprep.subr.mxu0 %v276
    %320 = vmatpush1.msra.mxu0 %v275
    %321 = vmatprep.subr.mxu0 %v278
    %322 = vmatpush1.msra.mxu0 %v277
    %323 = vmatprep.subr.mxu0 %v280
    %324 = vmatpush1.msra.mxu0 %v279
    %325 = vmatprep.subr.mxu0 %v282
    %326 = vmatpush1.msra.mxu0 %v281
    %327 = vmatprep.subr.mxu0 %v284
    %328 = vmatpush1.msra.mxu0 %v283
    %329 = vmatprep.subr.mxu0 %v286
    %330 = vmatpush1.msra.mxu0 %v285
    %331 = vmatprep.subr.mxu0 %v288
    %332 = vmatpush1.msra.mxu0 %v287
    %333 = vmatprep.subr.mxu0 %v290
    %334 = vmatpush1.msra.mxu0 %v289
    %335 = vmatprep.subr.mxu0 %v292
    %336 = vmatpush1.msra.mxu0 %v291
    %337 = vmatprep.subr.mxu0 %v294
    %338 = vmatpush1.msra.mxu0 %v293
    %339 = vmatprep.subr.mxu0 %v296
    %340 = vmatpush1.msra.mxu0 %v295
    %341 = vmatprep.subr.mxu0 %v298
    %342 = vmatpush1.msra.mxu0 %v297
    %343 = vmatprep.subr.mxu0 %v300
    %344 = vmatpush1.msra.mxu0 %v299
    %345 = vmatprep.subr.mxu0 %v302
    %346 = vmatpush1.msra.mxu0 %v301
    %347 = vmatprep.subr.mxu0 %v304
    %348 = vmatpush1.msra.mxu0 %v303
    %349 = vmatprep.subr.mxu0 %v306
    %350 = vmatpush1.msra.mxu0 %v305
    %351 = vmatprep.subr.mxu0 0.0
    %352 = vmatpush1.msra.mxu0 0.0
    %353 = vmatprep.subr.mxu0 0.0
    %354 = vmatpush1.msra.mxu0 0.0
    %355 = vmatprep.subr.mxu0 0.0
    %356 = vmatpush1.msra.mxu0 0.0
    %357 = vmatprep.subr.mxu0 0.0
    %358 = vmatpush1.msra.mxu0 0.0
    %359 = vmatprep.subr.mxu0 0.0
    %360 = vmatpush1.msra.mxu0 0.0
    %361 = vmatprep.subr.mxu0 0.0
    %362 = vmatpush1.msra.mxu0 0.0
    %363 = vmatprep.subr.mxu0 0.0
    %364 = vmatpush1.msra.mxu0 0.0
    %365 = vmatprep.subr.mxu0 0.0
    %366 = vmatpush1.msra.mxu0 0.0
    %367 = vmatprep.subr.mxu0 0.0
    %368 = vmatpush1.msra.mxu0 0.0
    %369 = vmatprep.subr.mxu0 0.0
    %370 = vmatpush1.msra.mxu0 0.0
    %371 = vmatprep.subr.mxu0 0.0
    %372 = vmatpush1.msra.mxu0 0.0
    %373 = vmatprep.subr.mxu0 0.0
    %374 = vmatpush1.msra.mxu0 0.0
    %375 = vmatprep.subr.mxu0 0.0
    %376 = vmatpush1.msra.mxu0 0.0
    %377 = vmatprep.subr.mxu0 0.0
    %378 = vmatpush1.msra.mxu0 0.0
    %379 = vmatprep.subr.mxu0 0.0
    %380 = vmatpush1.msra.mxu0 0.0
    %381 = vmatprep.subr.mxu0 0.0
    %382 = vmatpush1.msra.mxu0 0.0
    %383 = vmatprep.mubr.f32.mxu0 0.0
    %384 = vmatmul.mubr.f32.gmra.mrb[0].mxu0 %v197
    %v385 = vpop.f32.mrb[0].mxu0
    %v386 = vadd.f32 %v312, %v385
    %v387 = vpop.f32.mrb[0].mxu0
    %v388 = vadd.f32 %v316, %v387
    %389 = vmatprep.mubr.f32.mxu0 0.0
    %390 = vmatmul.mubr.f32.gmra.mrb[0].mxu0 %v202
    %v391 = vpop.f32.mrb[0].mxu0
    %v392 = vadd.f32 %v312, %v391
    %v393 = vpop.f32.mrb[0].mxu0
    %v394 = vadd.f32 %v316, %v393
    %395 = vmatprep.mubr.f32.mxu0 0.0
    %396 = vmatmul.mubr.f32.gmra.mrb[0].mxu0 %v207
    %v397 = vpop.f32.mrb[0].mxu0
    %v398 = vadd.f32 %v312, %v397
    %v399 = vpop.f32.mrb[0].mxu0
    %v400 = vadd.f32 %v316, %v399
    %401 = vmatprep.mubr.f32.mxu0 0.0
    %402 = vmatmul.mubr.f32.gmra.mrb[0].mxu0 %v212
    %v403 = vpop.f32.mrb[0].mxu0
    %v404 = vadd.f32 %v312, %v403
    %v405 = vpop.f32.mrb[0].mxu0
    %v406 = vadd.f32 %v316, %v405
    %407 = vmatprep.mubr.f32.mxu0 0.0
    %408 = vmatmul.mubr.f32.gmra.mrb[0].mxu0 %v217
    %v409 = vpop.f32.mrb[0].mxu0
    %v410 = vadd.f32 %v312, %v409
    %v411 = vpop.f32.mrb[0].mxu0
    %v412 = vadd.f32 %v316, %v411
    %413 = vmatprep.mubr.f32.mxu0 0.0
    %414 = vmatmul.mubr.f32.gmra.mrb[0].mxu0 %v222
    %v415 = vpop.f32.mrb[0].mxu0
    %v416 = vadd.f32 %v312, %v415
    %v417 = vpop.f32.mrb[0].mxu0
    %v418 = vadd.f32 %v316, %v417
    %419 = vmatprep.mubr.f32.mxu0 0.0
    %420 = vmatmul.mubr.f32.gmra.mrb[0].mxu0 %v227
    %v421 = vpop.f32.mrb[0].mxu0
    %v422 = vadd.f32 %v312, %v421
    %v423 = vpop.f32.mrb[0].mxu0
    %v424 = vadd.f32 %v316, %v423
    %425 = vmatprep.mubr.f32.mxu0 0.0
    %426 = vmatmul.mubr.f32.gmra.mrb[0].mxu0 %v232
    %v427 = vpop.f32.mrb[0].mxu0
    %v428 = vadd.f32 %v312, %v427
    %v429 = vpop.f32.mrb[0].mxu0
    %v430 = vadd.f32 %v316, %v429
    %431 = vmatprep.mubr.f32.mxu0 0.0
    %432 = vmatmul.mubr.f32.gmra.mrb[0].mxu0 %v237
    %v433 = vpop.f32.mrb[0].mxu0
    %v434 = vadd.f32 %v312, %v433
    %v435 = vpop.f32.mrb[0].mxu0
    %v436 = vadd.f32 %v316, %v435
    %437 = vmatprep.mubr.f32.mxu0 0.0
    %438 = vmatmul.mubr.f32.gmra.mrb[0].mxu0 %v242
    %v439 = vpop.f32.mrb[0].mxu0
    %v440 = vadd.f32 %v312, %v439
    %v441 = vpop.f32.mrb[0].mxu0
    %v442 = vadd.f32 %v316, %v441
    %443 = vmatprep.mubr.f32.mxu0 0.0
    %444 = vmatmul.mubr.f32.gmra.mrb[0].mxu0 %v247
    %v445 = vpop.f32.mrb[0].mxu0
    %v446 = vadd.f32 %v312, %v445
    %v447 = vpop.f32.mrb[0].mxu0
    %v448 = vadd.f32 %v316, %v447
    %449 = vmatprep.mubr.f32.mxu0 0.0
    %450 = vmatmul.mubr.f32.gmra.mrb[0].mxu0 %v252
    %v451 = vpop.f32.mrb[0].mxu0
    %v452 = vadd.f32 %v312, %v451
    %v453 = vpop.f32.mrb[0].mxu0
    %v454 = vadd.f32 %v316, %v453
    %455 = vmatprep.mubr.f32.mxu0 0.0
    %456 = vmatmul.mubr.f32.gmra.mrb[0].mxu0 %v257
    %v457 = vpop.f32.mrb[0].mxu0
    %v458 = vadd.f32 %v312, %v457
    %v459 = vpop.f32.mrb[0].mxu0
    %v460 = vadd.f32 %v316, %v459
    %461 = vmatprep.mubr.f32.mxu0 0.0
    %462 = vmatmul.mubr.f32.gmra.mrb[0].mxu0 %v262
    %v463 = vpop.f32.mrb[0].mxu0
    %v464 = vadd.f32 %v312, %v463
    %v465 = vpop.f32.mrb[0].mxu0
    %v466 = vadd.f32 %v316, %v465
    %467 = vmatprep.mubr.f32.mxu0 0.0
    %468 = vmatmul.mubr.f32.gmra.mrb[0].mxu0 %v267
    %v469 = vpop.f32.mrb[0].mxu0
    %v470 = vadd.f32 %v312, %v469
    %v471 = vpop.f32.mrb[0].mxu0
    %v472 = vadd.f32 %v316, %v471
    %473 = vmatprep.mubr.f32.mxu0 0.0
    %474 = vmatmul.mubr.f32.gmra.mrb[0].mxu0 %v272
    %v475 = vpop.f32.mrb[0].mxu0
    %v476 = vadd.f32 %v312, %v475
    %v477 = vpop.f32.mrb[0].mxu0
    %v478 = vadd.f32 %v316, %v477
    %479 = vdwg.mxu0
    %v480 = vld [vmem:[#allocation8] sm:$0xff]
    %v481 = vld [vmem:[#allocation8 + $0x8] sm:$0xff]
    %v482 = vld [vmem:[#allocation8 + $0x10] sm:$0xff]
    %v483 = vld [vmem:[#allocation8 + $0x18] sm:$0xff]
    %v484 = vld [vmem:[#allocation8 + $0x20] sm:$0xff]
    %v485 = vld [vmem:[#allocation8 + $0x28] sm:$0xff]
    %v486 = vld [vmem:[#allocation8 + $0x30] sm:$0xff]
    %v487 = vld [vmem:[#allocation8 + $0x38] sm:$0xff]
    %v488 = vld [vmem:[#allocation8 + $0x40] sm:$0xff]
    %v489 = vld [vmem:[#allocation8 + $0x48] sm:$0xff]
    %v490 = vld [vmem:[#allocation8 + $0x50] sm:$0xff]
    %v491 = vld [vmem:[#allocation8 + $0x58] sm:$0xff]
    %v492 = vld [vmem:[#allocation8 + $0x60] sm:$0xff]
    %v493 = vld [vmem:[#allocation8 + $0x68] sm:$0xff]
    %v494 = vld [vmem:[#allocation8 + $0x70] sm:$0xff]
    %v495 = vld [vmem:[#allocation8 + $0x78] sm:$0xff]
    %v496 = vld [vmem:[#allocation8 + $0x80] sm:$0xff]
    %v497 = vld [vmem:[#allocation8 + $0x88] sm:$0xff]
    %v498 = vld [vmem:[#allocation8 + $0x90] sm:$0xff]
    %v499 = vld [vmem:[#allocation8 + $0x98] sm:$0xff]
    %v500 = vld [vmem:[#allocation8 + $0xa0] sm:$0xff]
    %v501 = vld [vmem:[#allocation8 + $0xa8] sm:$0xff]
    %v502 = vld [vmem:[#allocation8 + $0xb0] sm:$0xff]
    %v503 = vld [vmem:[#allocation8 + $0xb8] sm:$0xff]
    %v504 = vld [vmem:[#allocation8 + $0xc0] sm:$0xff]
    %v505 = vld [vmem:[#allocation8 + $0xc8] sm:$0xff]
    %v506 = vld [vmem:[#allocation8 + $0xd0] sm:$0xff]
    %v507 = vld [vmem:[#allocation8 + $0xd8] sm:$0xff]
    %v508 = vld [vmem:[#allocation8 + $0xe0] sm:$0xff]
    %v509 = vld [vmem:[#allocation8 + $0xe8] sm:$0xff]
    %v510 = vld [vmem:[#allocation8 + $0xf0] sm:$0xff]
    %v511 = vld [vmem:[#allocation8 + $0xf8] sm:$0xff]
    %v512 = vld [vmem:[#allocation8 + $0x100] sm:$0xff]
    %v513 = vld [vmem:[#allocation8 + $0x108] sm:$0xff]
    %v514 = vld [vmem:[#allocation8 + $0x110] sm:$0xff]
    %v515 = vld [vmem:[#allocation8 + $0x118] sm:$0xff]
    %v516 = vld [vmem:[#allocation8 + $0x120] sm:$0xff]
    %v517 = vld [vmem:[#allocation8 + $0x128] sm:$0xff]
    %v518 = vld [vmem:[#allocation8 + $0x130] sm:$0xff]
    %v519 = vld [vmem:[#allocation8 + $0x138] sm:$0xff]
    %v520 = vld [vmem:[#allocation8 + $0x140] sm:$0xff]
    %v521 = vld [vmem:[#allocation8 + $0x148] sm:$0xff]
    %v522 = vld [vmem:[#allocation8 + $0x150] sm:$0xff]
    %v523 = vld [vmem:[#allocation8 + $0x158] sm:$0xff]
    %v524 = vld [vmem:[#allocation8 + $0x160] sm:$0xff]
    %v525 = vld [vmem:[#allocation8 + $0x168] sm:$0xff]
    %v526 = vld [vmem:[#allocation8 + $0x170] sm:$0xff]
    %v527 = vld [vmem:[#allocation8 + $0x178] sm:$0xff]
    %v528 = vld [vmem:[#allocation8 + $0x180] sm:$0xff]
    %v529 = vld [vmem:[#allocation8 + $0x188] sm:$0xff]
    %v530 = vld [vmem:[#allocation8 + $0x190] sm:$0xff]
    %v531 = vld [vmem:[#allocation8 + $0x198] sm:$0xff]
    %v532 = vld [vmem:[#allocation8 + $0x1a0] sm:$0xff]
    %v533 = vld [vmem:[#allocation8 + $0x1a8] sm:$0xff]
    %v534 = vld [vmem:[#allocation8 + $0x1b0] sm:$0xff]
    %v535 = vld [vmem:[#allocation8 + $0x1b8] sm:$0xff]
    %v536 = vld [vmem:[#allocation8 + $0x1c0] sm:$0xff]
    %v537 = vld [vmem:[#allocation8 + $0x1c8] sm:$0xff]
    %v538 = vld [vmem:[#allocation8 + $0x1d0] sm:$0xff]
    %v539 = vld [vmem:[#allocation8 + $0x1d8] sm:$0xff]
    %v540 = vld [vmem:[#allocation8 + $0x1e0] sm:$0xff]
    %v541 = vld [vmem:[#allocation8 + $0x1e8] sm:$0xff]
    %v542 = vld [vmem:[#allocation8 + $0x1f0] sm:$0xff]
    %v543 = vld [vmem:[#allocation8 + $0x1f8] sm:$0xff]
    %v544 = vld [vmem:[%s5] sm:$0x3]
    %v546 = vlaneseq
    %v547 = vshrl.u32 %v546, 7
    %v548 = vsub.s32 0, %v547
    %v549 = vrot.slane %v544, %v548
    %v550 = vlaneseq
    %v551 = vshrl.u32 %v550, 7
    %v552 = vsub.s32 1, %v551
    %v553 = vrot.slane %v544, %v552
    %556 = vmatprep.subr.mxu0 %v481
    %557 = vmatpush1.msra.mxu0 %v480
    %558 = vmatprep.subr.mxu0 %v483
    %559 = vmatpush1.msra.mxu0 %v482
    %560 = vmatprep.subr.mxu0 %v485
    %561 = vmatpush1.msra.mxu0 %v484
    %562 = vmatprep.subr.mxu0 %v487
    %563 = vmatpush1.msra.mxu0 %v486
    %564 = vmatprep.subr.mxu0 %v489
    %565 = vmatpush1.msra.mxu0 %v488
    %566 = vmatprep.subr.mxu0 %v491
    %567 = vmatpush1.msra.mxu0 %v490
    %568 = vmatprep.subr.mxu0 %v493
    %569 = vmatpush1.msra.mxu0 %v492
    %570 = vmatprep.subr.mxu0 %v495
    %571 = vmatpush1.msra.mxu0 %v494
    %572 = vmatprep.subr.mxu0 %v497
    %573 = vmatpush1.msra.mxu0 %v496
    %574 = vmatprep.subr.mxu0 %v499
    %575 = vmatpush1.msra.mxu0 %v498
    %576 = vmatprep.subr.mxu0 %v501
    %577 = vmatpush1.msra.mxu0 %v500
    %578 = vmatprep.subr.mxu0 %v503
    %579 = vmatpush1.msra.mxu0 %v502
    %580 = vmatprep.subr.mxu0 %v505
    %581 = vmatpush1.msra.mxu0 %v504
    %582 = vmatprep.subr.mxu0 %v507
    %583 = vmatpush1.msra.mxu0 %v506
    %584 = vmatprep.subr.mxu0 %v509
    %585 = vmatpush1.msra.mxu0 %v508
    %586 = vmatprep.subr.mxu0 %v511
    %587 = vmatpush1.msra.mxu0 %v510
    %588 = vmatprep.subr.mxu0 %v513
    %589 = vmatpush1.msra.mxu0 %v512
    %590 = vmatprep.subr.mxu0 %v515
    %591 = vmatpush1.msra.mxu0 %v514
    %592 = vmatprep.subr.mxu0 %v517
    %593 = vmatpush1.msra.mxu0 %v516
    %594 = vmatprep.subr.mxu0 %v519
    %595 = vmatpush1.msra.mxu0 %v518
    %596 = vmatprep.subr.mxu0 %v521
    %597 = vmatpush1.msra.mxu0 %v520
    %598 = vmatprep.subr.mxu0 %v523
    %599 = vmatpush1.msra.mxu0 %v522
    %600 = vmatprep.subr.mxu0 %v525
    %601 = vmatpush1.msra.mxu0 %v524
    %602 = vmatprep.subr.mxu0 %v527
    %603 = vmatpush1.msra.mxu0 %v526
    %604 = vmatprep.subr.mxu0 %v529
    %605 = vmatpush1.msra.mxu0 %v528
    %606 = vmatprep.subr.mxu0 %v531
    %607 = vmatpush1.msra.mxu0 %v530
    %608 = vmatprep.subr.mxu0 %v533
    %609 = vmatpush1.msra.mxu0 %v532
    %610 = vmatprep.subr.mxu0 %v535
    %611 = vmatpush1.msra.mxu0 %v534
    %612 = vmatprep.subr.mxu0 %v537
    %613 = vmatpush1.msra.mxu0 %v536
    %614 = vmatprep.subr.mxu0 %v539
    %615 = vmatpush1.msra.mxu0 %v538
    %616 = vmatprep.subr.mxu0 %v541
    %617 = vmatpush1.msra.mxu0 %v540
    %618 = vmatprep.subr.mxu0 %v543
    %619 = vmatpush1.msra.mxu0 %v542
    %620 = vmatprep.mubr.f32.mxu0 %v388
    %621 = vmatmul.mubr.f32.gmra.mrb[0].mxu0 %v386
    %v622 = vpop.f32.mrb[0].mxu0
    %v623 = vadd.f32 %v549, %v622
    %v624 = vpop.f32.mrb[0].mxu0
    %v625 = vadd.f32 %v553, %v624
    %626 = vmatprep.mubr.f32.mxu0 %v394
    %627 = vmatmul.mubr.f32.gmra.mrb[0].mxu0 %v392
    %v628 = vpop.f32.mrb[0].mxu0
    %v629 = vadd.f32 %v549, %v628
    %v630 = vpop.f32.mrb[0].mxu0
    %v631 = vadd.f32 %v553, %v630
    %632 = vmatprep.mubr.f32.mxu0 %v400
    %633 = vmatmul.mubr.f32.gmra.mrb[0].mxu0 %v398
    %v634 = vpop.f32.mrb[0].mxu0
    %v635 = vadd.f32 %v549, %v634
    %v636 = vpop.f32.mrb[0].mxu0
    %v637 = vadd.f32 %v553, %v636
    %638 = vmatprep.mubr.f32.mxu0 %v406
    %639 = vmatmul.mubr.f32.gmra.mrb[0].mxu0 %v404
    %v640 = vpop.f32.mrb[0].mxu0
    %v641 = vadd.f32 %v549, %v640
    %v642 = vpop.f32.mrb[0].mxu0
    %v643 = vadd.f32 %v553, %v642
    %644 = vmatprep.mubr.f32.mxu0 %v412
    %645 = vmatmul.mubr.f32.gmra.mrb[0].mxu0 %v410
    %v646 = vpop.f32.mrb[0].mxu0
    %v647 = vadd.f32 %v549, %v646
    %v648 = vpop.f32.mrb[0].mxu0
    %v649 = vadd.f32 %v553, %v648
    %650 = vmatprep.mubr.f32.mxu0 %v418
    %651 = vmatmul.mubr.f32.gmra.mrb[0].mxu0 %v416
    %v652 = vpop.f32.mrb[0].mxu0
    %v653 = vadd.f32 %v549, %v652
    %v654 = vpop.f32.mrb[0].mxu0
    %v655 = vadd.f32 %v553, %v654
    %656 = vmatprep.mubr.f32.mxu0 %v424
    %657 = vmatmul.mubr.f32.gmra.mrb[0].mxu0 %v422
    %v658 = vpop.f32.mrb[0].mxu0
    %v659 = vadd.f32 %v549, %v658
    %v660 = vpop.f32.mrb[0].mxu0
    %v661 = vadd.f32 %v553, %v660
    %662 = vmatprep.mubr.f32.mxu0 %v430
    %663 = vmatmul.mubr.f32.gmra.mrb[0].mxu0 %v428
    %v664 = vpop.f32.mrb[0].mxu0
    %v665 = vadd.f32 %v549, %v664
    %v666 = vpop.f32.mrb[0].mxu0
    %v667 = vadd.f32 %v553, %v666
    %668 = vmatprep.mubr.f32.mxu0 %v436
    %669 = vmatmul.mubr.f32.gmra.mrb[0].mxu0 %v434
    %v670 = vpop.f32.mrb[0].mxu0
    %v671 = vadd.f32 %v549, %v670
    %v672 = vpop.f32.mrb[0].mxu0
    %v673 = vadd.f32 %v553, %v672
    %674 = vmatprep.mubr.f32.mxu0 %v442
    %675 = vmatmul.mubr.f32.gmra.mrb[0].mxu0 %v440
    %v676 = vpop.f32.mrb[0].mxu0
    %v677 = vadd.f32 %v549, %v676
    %v678 = vpop.f32.mrb[0].mxu0
    %v679 = vadd.f32 %v553, %v678
    %680 = vmatprep.mubr.f32.mxu0 %v448
    %681 = vmatmul.mubr.f32.gmra.mrb[0].mxu0 %v446
    %v682 = vpop.f32.mrb[0].mxu0
    %v683 = vadd.f32 %v549, %v682
    %v684 = vpop.f32.mrb[0].mxu0
    %v685 = vadd.f32 %v553, %v684
    %686 = vmatprep.mubr.f32.mxu0 %v454
    %687 = vmatmul.mubr.f32.gmra.mrb[0].mxu0 %v452
    %v688 = vpop.f32.mrb[0].mxu0
    %v689 = vadd.f32 %v549, %v688
    %v690 = vpop.f32.mrb[0].mxu0
    %v691 = vadd.f32 %v553, %v690
    %692 = vmatprep.mubr.f32.mxu0 %v460
    %693 = vmatmul.mubr.f32.gmra.mrb[0].mxu0 %v458
    %v694 = vpop.f32.mrb[0].mxu0
    %v695 = vadd.f32 %v549, %v694
    %v696 = vpop.f32.mrb[0].mxu0
    %v697 = vadd.f32 %v553, %v696
    %698 = vmatprep.mubr.f32.mxu0 %v466
    %699 = vmatmul.mubr.f32.gmra.mrb[0].mxu0 %v464
    %v700 = vpop.f32.mrb[0].mxu0
    %v701 = vadd.f32 %v549, %v700
    %v702 = vpop.f32.mrb[0].mxu0
    %v703 = vadd.f32 %v553, %v702
    %704 = vmatprep.mubr.f32.mxu0 %v472
    %705 = vmatmul.mubr.f32.gmra.mrb[0].mxu0 %v470
    %v706 = vpop.f32.mrb[0].mxu0
    %v707 = vadd.f32 %v549, %v706
    %v708 = vpop.f32.mrb[0].mxu0
    %v709 = vadd.f32 %v553, %v708
    %710 = vmatprep.mubr.f32.mxu0 %v478
    %711 = vmatmul.mubr.f32.gmra.mrb[0].mxu0 %v476
    %v712 = vpop.f32.mrb[0].mxu0
    %v713 = vadd.f32 %v549, %v712
    %v714 = vpop.f32.mrb[0].mxu0
    %v715 = vadd.f32 %v553, %v714
    %716 = vdwg.mxu0
    %v717 = vxor.u32 %v623, 2147483648
    %v718 = vxor.u32 %v629, 2147483648
    %v719 = vxor.u32 %v635, 2147483648
    %v720 = vxor.u32 %v641, 2147483648
    %v721 = vxor.u32 %v647, 2147483648
    %v722 = vxor.u32 %v653, 2147483648
    %v723 = vxor.u32 %v659, 2147483648
    %v724 = vxor.u32 %v665, 2147483648
    %v725 = vxor.u32 %v671, 2147483648
    %v726 = vxor.u32 %v677, 2147483648
    %v727 = vxor.u32 %v683, 2147483648
    %v728 = vxor.u32 %v689, 2147483648
    %v729 = vxor.u32 %v695, 2147483648
    %v730 = vxor.u32 %v701, 2147483648
    %v731 = vxor.u32 %v707, 2147483648
    %v732 = vxor.u32 %v713, 2147483648
    %v733 = vmul.f32 %v717, 1.442695
    %v734 = vpow.pop %v733
    %v735 = vmul.f32 %v718, 1.442695
    %v736 = vpow.pop %v735
    %v737 = vmul.f32 %v719, 1.442695
    %v738 = vpow.pop %v737
    %v739 = vmul.f32 %v720, 1.442695
    %v740 = vpow.pop %v739
    %v741 = vmul.f32 %v721, 1.442695
    %v742 = vpow.pop %v741
    %v743 = vmul.f32 %v722, 1.442695
    %v744 = vpow.pop %v743
    %v745 = vmul.f32 %v723, 1.442695
    %v746 = vpow.pop %v745
    %v747 = vmul.f32 %v724, 1.442695
    %v748 = vpow.pop %v747
    %v749 = vmul.f32 %v725, 1.442695
    %v750 = vpow.pop %v749
    %v751 = vmul.f32 %v726, 1.442695
    %v752 = vpow.pop %v751
    %v753 = vmul.f32 %v727, 1.442695
    %v754 = vpow.pop %v753
    %v755 = vmul.f32 %v728, 1.442695
    %v756 = vpow.pop %v755
    %v757 = vmul.f32 %v729, 1.442695
    %v758 = vpow.pop %v757
    %v759 = vmul.f32 %v730, 1.442695
    %v760 = vpow.pop %v759
    %v761 = vmul.f32 %v731, 1.442695
    %v762 = vpow.pop %v761
    %v763 = vmul.f32 %v732, 1.442695
    %v764 = vpow.pop %v763
    %v765 = vadd.f32 %v734, 1.0
    %v766 = vadd.f32 %v736, 1.0
    %v767 = vadd.f32 %v738, 1.0
    %v768 = vadd.f32 %v740, 1.0
    %v769 = vadd.f32 %v742, 1.0
    %v770 = vadd.f32 %v744, 1.0
    %v771 = vadd.f32 %v746, 1.0
    %v772 = vadd.f32 %v748, 1.0
    %v773 = vadd.f32 %v750, 1.0
    %v774 = vadd.f32 %v752, 1.0
    %v775 = vadd.f32 %v754, 1.0
    %v776 = vadd.f32 %v756, 1.0
    %v777 = vadd.f32 %v758, 1.0
    %v778 = vadd.f32 %v760, 1.0
    %v779 = vadd.f32 %v762, 1.0
    %v780 = vadd.f32 %v764, 1.0
    %v781 = vrcp.pop %v765
    %v782 = vmul.f32 1.0, %v781
    %v783 = vrcp.pop %v766
    %v784 = vmul.f32 1.0, %v783
    %v785 = vrcp.pop %v767
    %v786 = vmul.f32 1.0, %v785
    %v787 = vrcp.pop %v768
    %v788 = vmul.f32 1.0, %v787
    %v789 = vrcp.pop %v769
    %v790 = vmul.f32 1.0, %v789
    %v791 = vrcp.pop %v770
    %v792 = vmul.f32 1.0, %v791
    %v793 = vrcp.pop %v771
    %v794 = vmul.f32 1.0, %v793
    %v795 = vrcp.pop %v772
    %v796 = vmul.f32 1.0, %v795
    %v797 = vrcp.pop %v773
    %v798 = vmul.f32 1.0, %v797
    %v799 = vrcp.pop %v774
    %v800 = vmul.f32 1.0, %v799
    %v801 = vrcp.pop %v775
    %v802 = vmul.f32 1.0, %v801
    %v803 = vrcp.pop %v776
    %v804 = vmul.f32 1.0, %v803
    %v805 = vrcp.pop %v777
    %v806 = vmul.f32 1.0, %v805
    %v807 = vrcp.pop %v778
    %v808 = vmul.f32 1.0, %v807
    %v809 = vrcp.pop %v779
    %v810 = vmul.f32 1.0, %v809
    %v811 = vrcp.pop %v780
    %v812 = vmul.f32 1.0, %v811
    %v813 = vtanh.pop %v625
    %v814 = vtanh.pop %v631
    %v815 = vtanh.pop %v637
    %v816 = vtanh.pop %v643
    %v817 = vtanh.pop %v649
    %v818 = vtanh.pop %v655
    %v819 = vtanh.pop %v661
    %v820 = vtanh.pop %v667
    %v821 = vtanh.pop %v673
    %v822 = vtanh.pop %v679
    %v823 = vtanh.pop %v685
    %v824 = vtanh.pop %v691
    %v825 = vtanh.pop %v697
    %v826 = vtanh.pop %v703
    %v827 = vtanh.pop %v709
    %v828 = vtanh.pop %v715
    %v829 = vsub.f32 1.0, %v782
    %v830 = vsub.f32 1.0, %v784
    %v831 = vsub.f32 1.0, %v786
    %v832 = vsub.f32 1.0, %v788
    %v833 = vsub.f32 1.0, %v790
    %v834 = vsub.f32 1.0, %v792
    %v835 = vsub.f32 1.0, %v794
    %v836 = vsub.f32 1.0, %v796
    %v837 = vsub.f32 1.0, %v798
    %v838 = vsub.f32 1.0, %v800
    %v839 = vsub.f32 1.0, %v802
    %v840 = vsub.f32 1.0, %v804
    %v841 = vsub.f32 1.0, %v806
    %v842 = vsub.f32 1.0, %v808
    %v843 = vsub.f32 1.0, %v810
    %v844 = vsub.f32 1.0, %v812
    %v845 = vmul.f32 %v829, %v813
    %v846 = vmul.f32 %v830, %v814
    %v847 = vmul.f32 %v831, %v815
    %v848 = vmul.f32 %v832, %v816
    %v849 = vmul.f32 %v833, %v817
    %v850 = vmul.f32 %v834, %v818
    %v851 = vmul.f32 %v835, %v819
    %v852 = vmul.f32 %v836, %v820
    %v853 = vmul.f32 %v837, %v821
    %v854 = vmul.f32 %v838, %v822
    %v855 = vmul.f32 %v839, %v823
    %v856 = vmul.f32 %v840, %v824
    %v857 = vmul.f32 %v841, %v825
    %v858 = vmul.f32 %v842, %v826
    %v859 = vmul.f32 %v843, %v827
    %v860 = vmul.f32 %v844, %v828
    %v861 = vld [vmem:[#allocation10] sm:$0xff]
    %v862 = vld [vmem:[#allocation10 + $0x8] sm:$0xff]
    %v863 = vld [vmem:[#allocation10 + $0x10] sm:$0xff]
    %v864 = vld [vmem:[#allocation10 + $0x18] sm:$0xff]
    %v865 = vld [vmem:[#allocation10 + $0x20] sm:$0xff]
    %v866 = vld [vmem:[#allocation10 + $0x28] sm:$0xff]
    %v867 = vld [vmem:[#allocation10 + $0x30] sm:$0xff]
    %v868 = vld [vmem:[#allocation10 + $0x38] sm:$0xff]
    %v869 = vld [vmem:[#allocation10 + $0x40] sm:$0xff]
    %v870 = vld [vmem:[#allocation10 + $0x48] sm:$0xff]
    %v871 = vld [vmem:[#allocation10 + $0x50] sm:$0xff]
    %v872 = vld [vmem:[#allocation10 + $0x58] sm:$0xff]
    %v873 = vld [vmem:[#allocation10 + $0x60] sm:$0xff]
    %v874 = vld [vmem:[#allocation10 + $0x68] sm:$0xff]
    %v875 = vld [vmem:[#allocation10 + $0x70] sm:$0xff]
    %v876 = vld [vmem:[#allocation10 + $0x78] sm:$0xff]
    %v877 = vld [vmem:[%s7] sm:$0x1]
    %v879 = vlaneseq
    %v880 = vshrl.u32 %v879, 7
    %v881 = vsub.s32 0, %v880
    %v882 = vrot.slane %v877, %v881
    %884 = vmatprep.subr.mxu0 0.0
    %885 = vmatpush1.msra.mxu0 %v861
    %886 = vmatprep.subr.mxu0 0.0
    %887 = vmatpush1.msra.mxu0 %v862
    %888 = vmatprep.subr.mxu0 0.0
    %889 = vmatpush1.msra.mxu0 %v863
    %890 = vmatprep.subr.mxu0 0.0
    %891 = vmatpush1.msra.mxu0 %v864
    %892 = vmatprep.subr.mxu0 0.0
    %893 = vmatpush1.msra.mxu0 %v865
    %894 = vmatprep.subr.mxu0 0.0
    %895 = vmatpush1.msra.mxu0 %v866
    %896 = vmatprep.subr.mxu0 0.0
    %897 = vmatpush1.msra.mxu0 %v867
    %898 = vmatprep.subr.mxu0 0.0
    %899 = vmatpush1.msra.mxu0 %v868
    %900 = vmatprep.subr.mxu0 0.0
    %901 = vmatpush1.msra.mxu0 %v869
    %902 = vmatprep.subr.mxu0 0.0
    %903 = vmatpush1.msra.mxu0 %v870
    %904 = vmatprep.subr.mxu0 0.0
    %905 = vmatpush1.msra.mxu0 %v871
    %906 = vmatprep.subr.mxu0 0.0
    %907 = vmatpush1.msra.mxu0 %v872
    %908 = vmatprep.subr.mxu0 0.0
    %909 = vmatpush1.msra.mxu0 %v873
    %910 = vmatprep.subr.mxu0 0.0
    %911 = vmatpush1.msra.mxu0 %v874
    %912 = vmatprep.subr.mxu0 0.0
    %913 = vmatpush1.msra.mxu0 %v875
    %914 = vmatprep.subr.mxu0 0.0
    %915 = vmatpush1.msra.mxu0 %v876
    %916 = vmatprep.subr.mxu0 0.0
    %917 = vmatpush1.msra.mxu0 0.0
    %918 = vmatprep.subr.mxu0 0.0
    %919 = vmatpush1.msra.mxu0 0.0
    %920 = vmatprep.subr.mxu0 0.0
    %921 = vmatpush1.msra.mxu0 0.0
    %922 = vmatprep.subr.mxu0 0.0
    %923 = vmatpush1.msra.mxu0 0.0
    %924 = vmatprep.subr.mxu0 0.0
    %925 = vmatpush1.msra.mxu0 0.0
    %926 = vmatprep.subr.mxu0 0.0
    %927 = vmatpush1.msra.mxu0 0.0
    %928 = vmatprep.subr.mxu0 0.0
    %929 = vmatpush1.msra.mxu0 0.0
    %930 = vmatprep.subr.mxu0 0.0
    %931 = vmatpush1.msra.mxu0 0.0
    %932 = vmatprep.subr.mxu0 0.0
    %933 = vmatpush1.msra.mxu0 0.0
    %934 = vmatprep.subr.mxu0 0.0
    %935 = vmatpush1.msra.mxu0 0.0
    %936 = vmatprep.subr.mxu0 0.0
    %937 = vmatpush1.msra.mxu0 0.0
    %938 = vmatprep.subr.mxu0 0.0
    %939 = vmatpush1.msra.mxu0 0.0
    %940 = vmatprep.subr.mxu0 0.0
    %941 = vmatpush1.msra.mxu0 0.0
    %942 = vmatprep.subr.mxu0 0.0
    %943 = vmatpush1.msra.mxu0 0.0
    %944 = vmatprep.subr.mxu0 0.0
    %945 = vmatpush1.msra.mxu0 0.0
    %946 = vmatprep.subr.mxu0 0.0
    %947 = vmatpush1.msra.mxu0 0.0
    %948 = vmatprep.mubr.f32.mxu0 0.0
    %949 = vmatmul.mubr.f32.gmra.mrb[0].mxu0 %v845
    %v950 = vpop.f32.mrb[0].mxu0
    %v951 = vadd.f32 %v882, %v950
    %v952 = vpop.f32.mrb[0].mxu0
    %953 = vmatprep.mubr.f32.mxu0 0.0
    %954 = vmatmul.mubr.f32.gmra.mrb[0].mxu0 %v846
    %v955 = vpop.f32.mrb[0].mxu0
    %v956 = vadd.f32 %v882, %v955
    %v957 = vpop.f32.mrb[0].mxu0
    %958 = vmatprep.mubr.f32.mxu0 0.0
    %959 = vmatmul.mubr.f32.gmra.mrb[0].mxu0 %v847
    %v960 = vpop.f32.mrb[0].mxu0
    %v961 = vadd.f32 %v882, %v960
    %v962 = vpop.f32.mrb[0].mxu0
    %963 = vmatprep.mubr.f32.mxu0 0.0
    %964 = vmatmul.mubr.f32.gmra.mrb[0].mxu0 %v848
    %v965 = vpop.f32.mrb[0].mxu0
    %v966 = vadd.f32 %v882, %v965
    %v967 = vpop.f32.mrb[0].mxu0
    %968 = vmatprep.mubr.f32.mxu0 0.0
    %969 = vmatmul.mubr.f32.gmra.mrb[0].mxu0 %v849
    %v970 = vpop.f32.mrb[0].mxu0
    %v971 = vadd.f32 %v882, %v970
    %v972 = vpop.f32.mrb[0].mxu0
    %973 = vmatprep.mubr.f32.mxu0 0.0
    %974 = vmatmul.mubr.f32.gmra.mrb[0].mxu0 %v850
    %v975 = vpop.f32.mrb[0].mxu0
    %v976 = vadd.f32 %v882, %v975
    %v977 = vpop.f32.mrb[0].mxu0
    %978 = vmatprep.mubr.f32.mxu0 0.0
    %979 = vmatmul.mubr.f32.gmra.mrb[0].mxu0 %v851
    %v980 = vpop.f32.mrb[0].mxu0
    %v981 = vadd.f32 %v882, %v980
    %v982 = vpop.f32.mrb[0].mxu0
    %983 = vmatprep.mubr.f32.mxu0 0.0
    %984 = vmatmul.mubr.f32.gmra.mrb[0].mxu0 %v852
    %v985 = vpop.f32.mrb[0].mxu0
    %v986 = vadd.f32 %v882, %v985
    %v987 = vpop.f32.mrb[0].mxu0
    %988 = vmatprep.mubr.f32.mxu0 0.0
    %989 = vmatmul.mubr.f32.gmra.mrb[0].mxu0 %v853
    %v990 = vpop.f32.mrb[0].mxu0
    %v991 = vadd.f32 %v882, %v990
    %v992 = vpop.f32.mrb[0].mxu0
    %993 = vmatprep.mubr.f32.mxu0 0.0
    %994 = vmatmul.mubr.f32.gmra.mrb[0].mxu0 %v854
    %v995 = vpop.f32.mrb[0].mxu0
    %v996 = vadd.f32 %v882, %v995
    %v997 = vpop.f32.mrb[0].mxu0
    %998 = vmatprep.mubr.f32.mxu0 0.0
    %999 = vmatmul.mubr.f32.gmra.mrb[0].mxu0 %v855
    %v1000 = vpop.f32.mrb[0].mxu0
    %v1001 = vadd.f32 %v882, %v1000
    %v1002 = vpop.f32.mrb[0].mxu0
    %1003 = vmatprep.mubr.f32.mxu0 0.0
    %1004 = vmatmul.mubr.f32.gmra.mrb[0].mxu0 %v856
    %v1005 = vpop.f32.mrb[0].mxu0
    %v1006 = vadd.f32 %v882, %v1005
    %v1007 = vpop.f32.mrb[0].mxu0
    %1008 = vmatprep.mubr.f32.mxu0 0.0
    %1009 = vmatmul.mubr.f32.gmra.mrb[0].mxu0 %v857
    %v1010 = vpop.f32.mrb[0].mxu0
    %v1011 = vadd.f32 %v882, %v1010
    %v1012 = vpop.f32.mrb[0].mxu0
    %1013 = vmatprep.mubr.f32.mxu0 0.0
    %1014 = vmatmul.mubr.f32.gmra.mrb[0].mxu0 %v858
    %v1015 = vpop.f32.mrb[0].mxu0
    %v1016 = vadd.f32 %v882, %v1015
    %v1017 = vpop.f32.mrb[0].mxu0
    %1018 = vmatprep.mubr.f32.mxu0 0.0
    %1019 = vmatmul.mubr.f32.gmra.mrb[0].mxu0 %v859
    %v1020 = vpop.f32.mrb[0].mxu0
    %v1021 = vadd.f32 %v882, %v1020
    %v1022 = vpop.f32.mrb[0].mxu0
    %1023 = vmatprep.mubr.f32.mxu0 0.0
    %1024 = vmatmul.mubr.f32.gmra.mrb[0].mxu0 %v860
    %v1025 = vpop.f32.mrb[0].mxu0
    %v1026 = vadd.f32 %v882, %v1025
    %v1027 = vpop.f32.mrb[0].mxu0
    %1028 = vdwg.mxu0
    %1029 = vst [vmem:[#allocation11] sm:$0xff] %v951
    %1030 = vst [vmem:[#allocation11 + $0x8] sm:$0xff] %v956
    %1031 = vst [vmem:[#allocation11 + $0x10] sm:$0xff] %v961
    %1032 = vst [vmem:[#allocation11 + $0x18] sm:$0xff] %v966
    %1033 = vst [vmem:[#allocation11 + $0x20] sm:$0xff] %v971
    %1034 = vst [vmem:[#allocation11 + $0x28] sm:$0xff] %v976
    %1035 = vst [vmem:[#allocation11 + $0x30] sm:$0xff] %v981
    %1036 = vst [vmem:[#allocation11 + $0x38] sm:$0xff] %v986
    %1037 = vst [vmem:[#allocation11 + $0x40] sm:$0xff] %v991
    %1038 = vst [vmem:[#allocation11 + $0x48] sm:$0xff] %v996
    %1039 = vst [vmem:[#allocation11 + $0x50] sm:$0xff] %v1001
    %1040 = vst [vmem:[#allocation11 + $0x58] sm:$0xff] %v1006
    %1041 = vst [vmem:[#allocation11 + $0x60] sm:$0xff] %v1011
    %1042 = vst [vmem:[#allocation11 + $0x68] sm:$0xff] %v1016
    %1043 = vst [vmem:[#allocation11 + $0x70] sm:$0xff] %v1021
    %1044 = vst [vmem:[#allocation11 + $0x78] sm:$0xff] %v1026
    // Predicated region
    $region54: #{tpu_custom_call.1} parent=1 // pred_check
      _
    $region55: #{tpu_custom_call.1} parent=1 // pred_check_branch
      %1046 = sbr.rel (0) target = $region57
    $region56: #{tpu_custom_call.1} parent=1 // pred_region
      %s1048 = ssub.s32 2048, 2048
      %1049 = vsyncadd [#allocation4], %s1048
      %s1050 = sshll.u32 [#allocation11], 4
      %s1051 = int_to_ptr.vmem [resolvable:$true] %s1050
      %1056 = dma.vmem_to_hbm [thread:$0]  %s1051, 2048, %s8, [#allocation4], 128, 128, 8
    $region57: #{tpu_custom_call.1} parent=1 // pred_fallthru
      _
    // Predicated region
    $region58: #{tpu_custom_call.1} parent=1 // pred_check
      _
    $region59: #{tpu_custom_call.1} parent=1 // pred_check_branch
      %1058 = sbr.rel (0) target = $region61
    $region60: #{tpu_custom_call.1} parent=1 // pred_region
      %1059 = dma.done [#allocation4], 2048
    $region61: #{tpu_custom_call.1} parent=1 // pred_fallthru
      _
    %1060 = vsyncpa [#allocation3], 1
    %1061 = vsyncpa [#allocation6], 1
    %1062 = vsyncpa [#allocation9], 1
    %1063 = vsyncpa [#allocation4], 1

</llo_original>
